<compile_context>
chip_gen: v7x
topology: tpu7x:2x2x1
jax: 0.10.0
libtpu: 0.0.40
codegen_flags: <defaults>
</compile_context>

<pallas_src>
import jax
import jax.numpy as jnp
from jax.experimental import pallas as pl
from jax.experimental.pallas import tpu as pltpu

LAGS = 4                       # in_channels of the x-path ChebConvs (lags)
FILTERS = 32                   # out_channels / hidden size
D = LAGS + FILTERS             # contraction dim of the fused gate matmul
DPAD = ((D + 15) // 16) * 16   # padded to 48; column D carries the bias "1"
MAX_TN = 4096                  # max node-tile width (lanes); VMEM stays < 8 MB


def _cdiv(a, m):
    return (a + m - 1) // m


def _round_up(a, m):
    return _cdiv(a, m) * m


def _choose_tiling(n):
    """Pick (node tile TN, padded node count Np).

    Big tiles amortize per-grid-step overhead; once the graph needs more than
    one 128-lane tile we force >= 2 grid steps so the "parallel" node axis can
    shard across both v7x TensorCores.
    """
    nr = _round_up(max(int(n), 1), 128)
    if nr <= 128:
        return nr, nr                       # single tile, nothing to split
    ntiles = max(2, _cdiv(nr, MAX_TN))
    tn = _round_up(_cdiv(nr, ntiles), 128)
    return tn, tn * ntiles


def _gconvlstm_kernel(xh_ref, c_ref, w_ref, wc_ref, wlin_ref, blin_ref,
                      hc_ref, y_ref):
    F = FILTERS
    C = c_ref[...]                                     # [F, TN] f32

    # All four gate pre-activations (+ bias, folded into the ones-column of
    # xh / column D of w) in ONE MXU pass: [4F, TN], bf16 in, f32 acc.
    g = jnp.dot(w_ref[...], xh_ref[...], preferred_element_type=jnp.float32)

    # Peephole weights stacked as [3F, 1]: aligned sublane slices, lane-bcast.
    w_ci = wc_ref[0 * F:1 * F, :]
    w_cf = wc_ref[1 * F:2 * F, :]
    w_co = wc_ref[2 * F:3 * F, :]

    i_gate = jax.nn.sigmoid(g[0 * F:1 * F, :] + w_ci * C)
    f_gate = jax.nn.sigmoid(g[1 * F:2 * F, :] + w_cf * C)
    t_cell = jnp.tanh(g[2 * F:3 * F, :])
    c_new = f_gate * C + i_gate * t_cell
    o_gate = jax.nn.sigmoid(g[3 * F:4 * F, :] + w_co * c_new)
    h_new = o_gate * jnp.tanh(c_new)

    # Readout: relu(H') @ wlin + b as a VPU multiply + sublane (XLU) reduce --
    # avoids a second M=1 MXU dispatch.
    hr = jnp.maximum(h_new, 0.0)
    y = jnp.sum(hr * wlin_ref[...], axis=0, keepdims=True) + blin_ref[0]

    # Packed lane-dense bf16 state slab (rows 0:F = H', F:2F = C') + tiny y.
    hc_ref[0:F, :] = h_new.astype(hc_ref.dtype)
    hc_ref[F:2 * F, :] = c_new.astype(hc_ref.dtype)
    y_ref[...] = y


def gconvlstm_step_packed(xh_T, c_T, params, tn=None):
    """Core fused step on channels-major (lane = node) inputs.

    xh_T : [DPAD, Np] bf16  rows 0:LAGS = X^T, LAGS:D = H^T, row D = 1.0 (bias)
    c_T  : [F, Np]    f32
    Returns (hc_T [2F, Np] bf16  -- rows 0:F = H', F:2F = C'; y_T [1, Np] f32).
    For sequence rollouts keep states in this layout: no per-step transposes.
    """
    w_all_T, wc_stack, wlin_col, blin = params
    F = FILTERS
    np_ = xh_T.shape[1]
    if tn is None:
        tn, np2 = _choose_tiling(np_)
        if np2 != np_:                      # caller-supplied Np with odd tiling
            tn = 128
    grid = (np_ // tn,)

    hc, y = pl.pallas_call(
        _gconvlstm_kernel,
        out_shape=(jax.ShapeDtypeStruct((2 * F, np_), jnp.bfloat16),
                   jax.ShapeDtypeStruct((1, np_), jnp.float32)),
        grid=grid,
        in_specs=[
            pl.BlockSpec((DPAD, tn), lambda i: (0, i)),         # [X;H;1]^T tile
            pl.BlockSpec((F, tn), lambda i: (0, i)),            # C^T tile
            pl.BlockSpec((4 * F, DPAD), lambda i: (0, 0)),      # fused gate W (+bias col), resident
            pl.BlockSpec((3 * F, 1), lambda i: (0, 0)),         # peephole weights
            pl.BlockSpec((F, 1), lambda i: (0, 0)),             # linear weight column
            pl.BlockSpec(memory_space=pltpu.MemorySpace.SMEM),  # linear bias scalar
        ],
        out_specs=(pl.BlockSpec((2 * F, tn), lambda i: (0, i)),
                   pl.BlockSpec((1, tn), lambda i: (0, i))),
        compiler_params=pltpu.CompilerParams(
            dimension_semantics=("parallel",)),                 # v7x: nodes over both TCs
    )(xh_T, c_T, w_all_T, wc_stack, wlin_col, blin)
    return hc, y


def _pack_inputs(x, h, c, np_):
    """Node-major [N, C] -> channels-major packed kernel inputs (done once)."""
    n = x.shape[0]
    pad = np_ - n
    if pad:
        x = jnp.pad(x, ((0, pad), (0, 0)))
        h = jnp.pad(h, ((0, pad), (0, 0)))
        c = jnp.pad(c, ((0, pad), (0, 0)))
    ones = jnp.ones((np_, 1), x.dtype)                      # bias column (col D)
    zeros = jnp.zeros((np_, DPAD - D - 1), x.dtype)
    xh_T = jnp.concatenate([x, h, ones, zeros], axis=1).T.astype(jnp.bfloat16)
    c_T = c.T.astype(jnp.float32)
    return xh_T, c_T


def gconvlstm_forward(x, edge_index, edge_weight, h, c, params):
    """Module-API wrapper (node-major). Returns (y, h_0, c_0)."""
    del edge_index, edge_weight            # K=1 ChebConv never applies the Laplacian
    n = x.shape[0]
    F = FILTERS
    tn, np_ = _choose_tiling(n)
    xh_T, c_T = _pack_inputs(x, h, c, np_)
    hc, y = gconvlstm_step_packed(xh_T, c_T, params, tn)
    h0 = hc[0:F, :n].T.astype(jnp.float32)          # [N, F]
    c0 = hc[F:2 * F, :n].T.astype(jnp.float32)      # [N, F]
    return y[:, :n].T, h0, c0                       # y: [N, 1]


def init_params(key):
    """Deterministic synthetic parameters matching the module's __init__ shapes,
    packed into the fused / transposed kernel layout (bias folded into W)."""
    ks = jax.random.split(key, 8)
    s = 0.1
    F = FILTERS
    # ChebConv(K=1) weights for the x-path, gate order (i, f, c, o) on last dim.
    wx = s * jax.random.normal(ks[0], (LAGS, 4 * F), jnp.float32)
    # ChebConv(K=1) weights for the h-path.
    wh = s * jax.random.normal(ks[1], (F, 4 * F), jnp.float32)
    # Combined bias per gate = cheb_x bias + cheb_h bias + gate bias.
    b = (s * jax.random.normal(ks[2], (4 * F,), jnp.float32)
         + s * jax.random.normal(ks[3], (4 * F,), jnp.float32)
         + s * jax.random.normal(ks[4], (4 * F,), jnp.float32))
    # Peephole weights w_c_i, w_c_f, w_c_o (each originally (1, F)).
    wc = s * jax.random.normal(ks[5], (3, F), jnp.float32)
    # Final Linear(filters, 1).
    wlin = s * jax.random.normal(ks[6], (F, 1), jnp.float32)
    blin = s * jax.random.normal(ks[7], (1,), jnp.float32)

    # Fused, transposed gate weight [4F, DPAD]; column D carries the bias
    # (paired with the constant-1 row of the packed input), rest of pad is 0.
    w_all = jnp.concatenate([wx, wh], axis=0)                        # [D, 4F]
    w_all_T = jnp.zeros((4 * F, DPAD), jnp.float32)
    w_all_T = w_all_T.at[:, :D].set(w_all.T)
    w_all_T = w_all_T.at[:, D].set(b)
    w_all_T = w_all_T.astype(jnp.bfloat16)
    wc_stack = wc.reshape(3 * F, 1)                                  # sublane-stacked peepholes
    wlin_col = wlin                                                  # [F, 1] column
    return (w_all_T, wc_stack, wlin_col, blin)


def _reference_forward(x, h, c, params):
    """Pure-JAX f32 reference of the same math (correctness check)."""
    w_all_T, wc_stack, wlin_col, blin = params
    F = FILTERS
    Wf = w_all_T.astype(jnp.float32)
    W = Wf[:, :D].T                                                  # [D, 4F]
    b = Wf[:, D]                                                     # [4F]
    xh = jnp.concatenate([x, h], axis=1).astype(jnp.bfloat16).astype(jnp.float32)
    g = xh @ W + b[None, :]
    w_ci = wc_stack[0 * F:1 * F, 0]
    w_cf = wc_stack[1 * F:2 * F, 0]
    w_co = wc_stack[2 * F:3 * F, 0]
    i = jax.nn.sigmoid(g[:, 0 * F:1 * F] + w_ci * c)
    f = jax.nn.sigmoid(g[:, 1 * F:2 * F] + w_cf * c)
    t = jnp.tanh(g[:, 2 * F:3 * F])
    c_new = f * c + i * t
    o = jax.nn.sigmoid(g[:, 3 * F:4 * F] + w_co * c_new)
    h_new = o * jnp.tanh(c_new)
    y = jnp.maximum(h_new, 0.0) @ wlin_col + blin[0]
    return y, h_new, c_new


if __name__ == "__main__":
    key = jax.random.PRNGKey(0)
    k_x, k_h, k_c, k_p = jax.random.split(key, 4)

    N = 200  # graph nodes: exercises padding (200 -> 256) and a 2-step grid
    x = jax.random.normal(k_x, (N, LAGS), jnp.float32)        # node features (lags=4)
    h = jax.random.normal(k_h, (N, FILTERS), jnp.float32)     # hidden state
    c = jax.random.normal(k_c, (N, FILTERS), jnp.float32)     # cell state
    # Ring graph (unused by K=1 ChebConv, passed for API parity).
    edge_index = jnp.stack([jnp.arange(N), (jnp.arange(N) + 1) % N]).astype(jnp.int32)
    edge_weight = jnp.ones((N,), jnp.float32)

    params = init_params(k_p)

    # --- module-API single step ---
    y, h0, c0 = gconvlstm_forward(x, edge_index, edge_weight, h, c, params)
    jax.block_until_ready((y, h0, c0))
    assert y.shape == (N, 1) and h0.shape == (N, FILTERS) and c0.shape == (N, FILTERS)

    # Correctness vs a pure-JAX f32 reference (states are stored bf16 in the
    # kernel's output slab, so round the reference states the same way).
    y_r, h_r, c_r = _reference_forward(x, h, c, params)
    h_rb = h_r.astype(jnp.bfloat16).astype(jnp.float32)
    c_rb = c_r.astype(jnp.bfloat16).astype(jnp.float32)
    tol = 3e-2
    assert float(jnp.max(jnp.abs(y - y_r))) < tol
    assert float(jnp.max(jnp.abs(h0 - h_rb))) < tol
    assert float(jnp.max(jnp.abs(c0 - c_rb))) < tol

    # --- channels-major rollout path (no per-step transposes / slices) ---
    tn, np_ = _choose_tiling(N)
    xh_T, c_T = _pack_inputs(x, h, c, np_)          # one-time layout pack
    y_cm = None
    for _ in range(3):
        hc, y_cm = gconvlstm_step_packed(xh_T, c_T, params, tn)
        xh_T = xh_T.at[LAGS:D, :].set(hc[0:FILTERS, :])      # new H (bf16, no cast)
        c_T = hc[FILTERS:2 * FILTERS, :].astype(jnp.float32)  # new C
    jax.block_until_ready((hc, y_cm))
    assert bool(jnp.all(jnp.isfinite(y_cm)))
    assert bool(jnp.all(jnp.isfinite(hc.astype(jnp.float32))))

    # TODO(synk): for K>1 ChebConv the normalized-Laplacian SpMV (edge_index /
    # edge_weight) would need a gather/scatter stage; dead code for K=1.

    print("KERNEL_OK")
</pallas_src>

<mosaic_0001>
module attributes {stable_mosaic.version = 11 : i64} {
  func.func @_gconvlstm_kernel(%arg0: i32, %arg1: memref<48x128xbf16, #tpu.memory_space<vmem>>, %arg2: memref<32x128xf32, #tpu.memory_space<vmem>>, %arg3: memref<128x48xbf16, #tpu.memory_space<vmem>>, %arg4: memref<96x1xf32, #tpu.memory_space<vmem>>, %arg5: memref<32x1xf32, #tpu.memory_space<vmem>>, %arg6: memref<1xf32, #tpu.memory_space<smem>>, %arg7: memref<64x128xbf16, #tpu.memory_space<vmem>>, %arg8: memref<1x128xf32, #tpu.memory_space<vmem>>) attributes {dimension_semantics = [#tpu.dimension_semantics<parallel>], iteration_bounds = array<i64: 2>, scalar_prefetch = 0 : i64, scratch_operands = 0 : i64, tpu.core_type = #tpu.core_type<tc>, window_params = [{transform_indices = @transform_0, window_bounds = array<i64: 48, 128>}, {transform_indices = @transform_1, window_bounds = array<i64: 32, 128>}, {pipeline_mode = #tpu.pipeline_mode<synchronous>, transform_indices = @transform_2, window_bounds = array<i64: 128, 48>}, {pipeline_mode = #tpu.pipeline_mode<synchronous>, transform_indices = @transform_3, window_bounds = array<i64: 96, 1>}, {pipeline_mode = #tpu.pipeline_mode<synchronous>, transform_indices = @transform_4, window_bounds = array<i64: 32, 1>}, {transform_indices = @transform_5, window_bounds = array<i64: 1>}, {transform_indices = @transform_6, window_bounds = array<i64: 64, 128>}, {transform_indices = @transform_7, window_bounds = array<i64: 1, 128>}]} {
    %c0 = arith.constant 0 : index
    %c0_0 = arith.constant 0 : index
    %0 = vector.load %arg2[%c0, %c0_0] : memref<32x128xf32, #tpu.memory_space<vmem>>, vector<32x128xf32>
    %c0_1 = arith.constant 0 : index
    %c0_2 = arith.constant 0 : index
    %1 = vector.load %arg3[%c0_1, %c0_2] : memref<128x48xbf16, #tpu.memory_space<vmem>>, vector<128x48xbf16>
    %c0_3 = arith.constant 0 : index
    %c0_4 = arith.constant 0 : index
    %2 = vector.load %arg1[%c0_3, %c0_4] : memref<48x128xbf16, #tpu.memory_space<vmem>>, vector<48x128xbf16>
    %cst = arith.constant dense<0.000000e+00> : vector<128x128xf32>
    %3 = tpu.matmul %1, %2, %cst {dimension_numbers = #tpu.dot_dimension_numbers<[1], [0], [0], [1], [0, 0, 1, 1], [], []>} : vector<128x48xbf16>, vector<48x128xbf16>, vector<128x128xf32> -> vector<128x128xf32>
    %c0_5 = arith.constant 0 : index
    %c0_6 = arith.constant 0 : index
    %4 = vector.load %arg4[%c0_5, %c0_6] : memref<96x1xf32, #tpu.memory_space<vmem>>, vector<32x1xf32>
    %c32 = arith.constant 32 : index
    %c0_7 = arith.constant 0 : index
    %5 = vector.load %arg4[%c32, %c0_7] : memref<96x1xf32, #tpu.memory_space<vmem>>, vector<32x1xf32>
    %c64 = arith.constant 64 : index
    %c0_8 = arith.constant 0 : index
    %6 = vector.load %arg4[%c64, %c0_8] : memref<96x1xf32, #tpu.memory_space<vmem>>, vector<32x1xf32>
    %7 = vector.extract_strided_slice %3 {offsets = [0, 0], sizes = [32, 128], strides = [1, 1]} : vector<128x128xf32> to vector<32x128xf32>
    %8 = vector.broadcast %4 : vector<32x1xf32> to vector<32x128xf32>
    %9 = arith.mulf %8, %0 : vector<32x128xf32>
    %10 = arith.addf %7, %9 : vector<32x128xf32>
    %11 = arith.negf %10 : vector<32x128xf32>
    %12 = math.exp %11 : vector<32x128xf32>
    %cst_9 = arith.constant 1.000000e+00 : f32
    %13 = vector.broadcast %cst_9 : f32 to vector<32x128xf32>
    %14 = arith.addf %13, %12 : vector<32x128xf32>
    %15 = arith.divf %13, %14 : vector<32x128xf32>
    %16 = vector.extract_strided_slice %3 {offsets = [32, 0], sizes = [32, 128], strides = [1, 1]} : vector<128x128xf32> to vector<32x128xf32>
    %17 = vector.broadcast %5 : vector<32x1xf32> to vector<32x128xf32>
    %18 = arith.mulf %17, %0 : vector<32x128xf32>
    %19 = arith.addf %16, %18 : vector<32x128xf32>
    %20 = arith.negf %19 : vector<32x128xf32>
    %21 = math.exp %20 : vector<32x128xf32>
    %cst_10 = arith.constant 1.000000e+00 : f32
    %22 = vector.broadcast %cst_10 : f32 to vector<32x128xf32>
    %23 = arith.addf %22, %21 : vector<32x128xf32>
    %24 = arith.divf %22, %23 : vector<32x128xf32>
    %25 = vector.extract_strided_slice %3 {offsets = [64, 0], sizes = [32, 128], strides = [1, 1]} : vector<128x128xf32> to vector<32x128xf32>
    %26 = math.tanh %25 : vector<32x128xf32>
    %27 = arith.mulf %24, %0 : vector<32x128xf32>
    %28 = arith.mulf %15, %26 : vector<32x128xf32>
    %29 = arith.addf %27, %28 : vector<32x128xf32>
    %30 = vector.extract_strided_slice %3 {offsets = [96, 0], sizes = [32, 128], strides = [1, 1]} : vector<128x128xf32> to vector<32x128xf32>
    %31 = vector.broadcast %6 : vector<32x1xf32> to vector<32x128xf32>
    %32 = arith.mulf %31, %29 : vector<32x128xf32>
    %33 = arith.addf %30, %32 : vector<32x128xf32>
    %34 = arith.negf %33 : vector<32x128xf32>
    %35 = math.exp %34 : vector<32x128xf32>
    %cst_11 = arith.constant 1.000000e+00 : f32
    %36 = vector.broadcast %cst_11 : f32 to vector<32x128xf32>
    %37 = arith.addf %36, %35 : vector<32x128xf32>
    %38 = arith.divf %36, %37 : vector<32x128xf32>
    %39 = math.tanh %29 : vector<32x128xf32>
    %40 = arith.mulf %38, %39 : vector<32x128xf32>
    %cst_12 = arith.constant 0.000000e+00 : f32
    %41 = vector.broadcast %cst_12 : f32 to vector<32x128xf32>
    %42 = arith.maximumf %40, %41 : vector<32x128xf32>
    %c0_13 = arith.constant 0 : index
    %c0_14 = arith.constant 0 : index
    %43 = vector.load %arg5[%c0_13, %c0_14] : memref<32x1xf32, #tpu.memory_space<vmem>>, vector<32x1xf32>
    %44 = vector.broadcast %43 : vector<32x1xf32> to vector<32x128xf32>
    %45 = arith.mulf %42, %44 : vector<32x128xf32>
    %cst_15 = arith.constant dense<0.000000e+00> : vector<128xf32>
    %46 = vector.multi_reduction <add>, %45, %cst_15 [0] : vector<32x128xf32> to vector<128xf32>
    %47 = vector.shape_cast %46 : vector<128xf32> to vector<1x128xf32>
    %c0_16 = arith.constant 0 : index
    %48 = memref.load %arg6[%c0_16] : memref<1xf32, #tpu.memory_space<smem>>
    %49 = vector.broadcast %48 : f32 to vector<1x128xf32>
    %50 = arith.addf %47, %49 : vector<1x128xf32>
    %51 = arith.truncf %40 : vector<32x128xf32> to vector<32x128xbf16>
    %c0_17 = arith.constant 0 : index
    %c0_18 = arith.constant 0 : index
    %52 = vector.load %arg7[%c0_17, %c0_18] : memref<64x128xbf16, #tpu.memory_space<vmem>>, vector<32x128xbf16>
    tpu.vector_store %arg7[%c0_17, %c0_18], %51 {strides = array<i32>} : memref<64x128xbf16, #tpu.memory_space<vmem>>, vector<32x128xbf16>,
    %53 = arith.truncf %29 : vector<32x128xf32> to vector<32x128xbf16>
    %c32_19 = arith.constant 32 : index
    %c0_20 = arith.constant 0 : index
    %54 = vector.load %arg7[%c32_19, %c0_20] : memref<64x128xbf16, #tpu.memory_space<vmem>>, vector<32x128xbf16>
    tpu.vector_store %arg7[%c32_19, %c0_20], %53 {strides = array<i32>} : memref<64x128xbf16, #tpu.memory_space<vmem>>, vector<32x128xbf16>,
    %c0_21 = arith.constant 0 : index
    %c0_22 = arith.constant 0 : index
    %55 = vector.load %arg8[%c0_21, %c0_22] : memref<1x128xf32, #tpu.memory_space<vmem>>, vector<1x128xf32>
    tpu.vector_store %arg8[%c0_21, %c0_22], %50 {strides = array<i32>} : memref<1x128xf32, #tpu.memory_space<vmem>>, vector<1x128xf32>,
    return
  }
  func.func @transform_0(%arg0: i32) -> (i32, i32) {
    %c0_i32 = arith.constant 0 : i32
    %c0_i32_0 = arith.constant 0 : i32
    return %c0_i32, %arg0 : i32, i32
  }
  func.func @transform_1(%arg0: i32) -> (i32, i32) {
    %c0_i32 = arith.constant 0 : i32
    %c0_i32_0 = arith.constant 0 : i32
    return %c0_i32, %arg0 : i32, i32
  }
  func.func @transform_2(%arg0: i32) -> (i32, i32) {
    %c0_i32 = arith.constant 0 : i32
    %c0_i32_0 = arith.constant 0 : i32
    %c0_i32_1 = arith.constant 0 : i32
    return %c0_i32, %c0_i32_0 : i32, i32
  }
  func.func @transform_3(%arg0: i32) -> (i32, i32) {
    %c0_i32 = arith.constant 0 : i32
    %c0_i32_0 = arith.constant 0 : i32
    %c0_i32_1 = arith.constant 0 : i32
    return %c0_i32, %c0_i32_0 : i32, i32
  }
  func.func @transform_4(%arg0: i32) -> (i32, i32) {
    %c0_i32 = arith.constant 0 : i32
    %c0_i32_0 = arith.constant 0 : i32
    %c0_i32_1 = arith.constant 0 : i32
    return %c0_i32, %c0_i32_0 : i32, i32
  }
  func.func @transform_5(%arg0: i32) -> i32 {
    %c0_i32 = arith.constant 0 : i32
    %c0_i32_0 = arith.constant 0 : i32
    return %c0_i32 : i32
  }
  func.func @transform_6(%arg0: i32) -> (i32, i32) {
    %c0_i32 = arith.constant 0 : i32
    %c0_i32_0 = arith.constant 0 : i32
    return %c0_i32, %arg0 : i32, i32
  }
  func.func @transform_7(%arg0: i32) -> (i32, i32) {
    %c0_i32 = arith.constant 0 : i32
    %c0_i32_0 = arith.constant 0 : i32
    return %c0_i32, %arg0 : i32, i32
  }
}

</mosaic_0001>

<llo_original>
// kernel: tpu_custom_call.1
$region0: #{tpu_custom_call.1}
  #allocation0 [shape = 'u32[]', space=smem, size = 0x4, offset = 0x4, fixed_abs, tag = 'smem constant byte address 0x4 - core index']
  #allocation1 [shape = 'u32[144,128]{1,0:T(1,128)}', space=vmem, size = 0x12000, scoped, tag = 'internal scratch']
  #allocation2 [shape = 'f32[1]{0:T(128)S(6)}', space=smem, size = 0x200, scoped, tag = 'scoped memory for tpu_custom_call.1']
  %s0 = inlined_call_operand.vmem [shape: bf16[48,256], index: 0, kind: input, shape index: {}]
  %s1 = inlined_call_operand.vmem [shape: f32[32,256], index: 1, kind: input, shape index: {}]
  %s2 = inlined_call_operand.vmem [shape: bf16[128,48], index: 2, kind: input, shape index: {}]
  %s3 = inlined_call_operand.vmem [shape: f32[96,1], index: 3, kind: input, shape index: {}]
  %s4 = inlined_call_operand.vmem [shape: f32[32,1], index: 4, kind: input, shape index: {}]
  %s5 = inlined_call_operand.<no memory space> [shape: f32[1], index: 5, kind: input, shape index: {}]
  %s6 = inlined_call_operand.hbm [shape: bf16[64,256], index: 6, kind: output, shape index: {0}]
  %s7 = inlined_call_operand.hbm [shape: f32[1,256], index: 7, kind: output, shape index: {1}]
  %8 = xla_tuple %s6, %s7
  %s9 = sld [smem:[#allocation0]]
  $region144: #{tpu_custom_call.1} parent=0
    _
  %s11 = ssub.s32 1, %s9
  %s12 = scalar_select 0, %s11, %s9
  %13 = sst [smem:[#allocation2]] %s5
  $region1: #{tpu_custom_call.1} parent=0
    #allocation3 [shape = 'u8[24576]{0}', space=vmem, size = 0x6000, scoped, tag = 'input window, operand 0']
    #allocation4 [shape = 'u8[32768]{0}', space=vmem, size = 0x8000, scoped, tag = 'input window, operand 1']
    #allocation5 [shape = 'u8[32768]{0}', space=vmem, size = 0x8000, scoped, tag = 'output window, operand 0']
    #allocation6 [shape = 's32[2]{0}', space=sflag, size = 0x8, scoped, tag = 'scoped memory for tpu_custom_call.1']
    #allocation7 [shape = 'u8[1024]{0}', space=vmem, size = 0x400, scoped, tag = 'output window, operand 1']
    #allocation8 [shape = 's32[2]{0}', space=sflag, size = 0x8, scoped, tag = 'scoped memory for tpu_custom_call.1']
    %14 = vsyncpa [#allocation6], 0
    %s15 = scalar_lea.sflag [#allocation6], 1
    %16 = vsyncpa %s15, 0
    %17 = vsyncpa [#allocation8], 0
    %s18 = scalar_lea.sflag [#allocation8], 1
    %19 = vsyncpa %s18, 0
    loop: start=0, step=1, limit=4
    $region2: #{tpu_custom_call.1} parent=1 // loop_pre_header
      _
    $region3: #{tpu_custom_call.1} parent=1 // loop_header
      %s21 = sphi 0, %s25
      %p22 = scmp.ge.s32.totalorder %s21, 4
      %s31 = sphi 0, %s33
      %s34 = sphi 0, %s31
      %s35 = sphi 0, %s34
      %s51 = sphi 0, %s35
      %s57 = sphi 0, %s59
      %s60 = sphi 0, %s57
      %s61 = sphi 0, %s60
      %s77 = sphi 0, %s61
      %s81 = sphi 0, %s81
      %s83 = sphi 0, %s81
      %s84 = sphi 0, %s83
      %s98 = sphi 0, %s84
      %s102 = sphi 0, %s102
      %s104 = sphi 0, %s102
      %s105 = sphi 0, %s104
      %s119 = sphi 0, %s105
      %s123 = sphi 0, %s123
      %s125 = sphi 0, %s123
      %s126 = sphi 0, %s125
      %s140 = sphi 0, %s126
      %s144 = sphi 0, %s144
      %s146 = sphi 0, %s144
      %s147 = sphi 0, %s146
      %s161 = sphi 0, %s147
      %s167 = sphi 0, %s169
      %s170 = sphi 0, %s167
      %s171 = sphi 0, %s170
      %s187 = sphi 0, %s171
      %s193 = sphi 0, %s195
      %s196 = sphi 0, %s193
      %s197 = sphi 0, %s196
      %s213 = sphi 0, %s197
    $region4: #{tpu_custom_call.1} parent=1 // loop_header_branch
      %24 = sbr.rel (%p22) target = $region8
    $region5: #{tpu_custom_call.1} parent=1 // loop_body
      %s26 = ssub.s32 %s21, 1
      %s27 = ssub.s32 %s21, 2
      %s28 = sadd.s32 %s21, 1
      %s29 = ssub.s32 %s21, %s28
      %p30 = scmp.eq.s32.totalorder %s29, 0
      %s32 = sadd.s32 %s31, 1
      %s33 = scalar_select %p30, %s31, %s32
      %p36 = pneg %p30
      %p37 = scmp.eq.s32.totalorder %s21, 1
      %p38 = por %p36, %p37
      %p39 = scmp.ne.s32.totalorder %s31, %s34
      %p40 = scmp.eq.s32.totalorder %s21, 0
      %p41 = por %p39, %p40
      %p42 = scmp.ne.s32.totalorder %s31, %s34
      %p43 = scmp.eq.s32.totalorder %s26, 1
      %p44 = por %p42, %p43
      %p45 = scmp.ne.s32.totalorder %s34, %s35
      %p46 = scmp.eq.s32.totalorder %s26, 0
      %p47 = por %p45, %p46
      %p48 = scmp.ne.s32.totalorder %s34, %s35
      %p49 = scmp.eq.s32.totalorder %s27, 1
      %p50 = por %p48, %p49
      %p52 = scmp.ne.s32.totalorder %s35, %s51
      %p53 = scmp.eq.s32.totalorder %s27, 0
      %p54 = por %p52, %p53
      %s55 = ssub.s32 %s21, %s28
      %p56 = scmp.eq.s32.totalorder %s55, 0
      %s58 = sadd.s32 %s57, 1
      %s59 = scalar_select %p56, %s57, %s58
      %p62 = pneg %p56
      %p63 = scmp.eq.s32.totalorder %s21, 1
      %p64 = por %p62, %p63
      %p65 = scmp.ne.s32.totalorder %s57, %s60
      %p66 = scmp.eq.s32.totalorder %s21, 0
      %p67 = por %p65, %p66
      %p68 = scmp.ne.s32.totalorder %s57, %s60
      %p69 = scmp.eq.s32.totalorder %s26, 1
      %p70 = por %p68, %p69
      %p71 = scmp.ne.s32.totalorder %s60, %s61
      %p72 = scmp.eq.s32.totalorder %s26, 0
      %p73 = por %p71, %p72
      %p74 = scmp.ne.s32.totalorder %s60, %s61
      %p75 = scmp.eq.s32.totalorder %s27, 1
      %p76 = por %p74, %p75
      %p78 = scmp.ne.s32.totalorder %s61, %s77
      %p79 = scmp.eq.s32.totalorder %s27, 0
      %p80 = por %p78, %p79
      %s82 = sadd.s32 %s81, 1
      %p85 = scmp.eq.s32.totalorder %s21, 1
      %p86 = scmp.ne.s32.totalorder %s81, %s83
      %p87 = scmp.eq.s32.totalorder %s21, 0
      %p88 = por %p86, %p87
      %p89 = scmp.ne.s32.totalorder %s81, %s83
      %p90 = scmp.eq.s32.totalorder %s26, 1
      %p91 = por %p89, %p90
      %p92 = scmp.ne.s32.totalorder %s83, %s84
      %p93 = scmp.eq.s32.totalorder %s26, 0
      %p94 = por %p92, %p93
      %p95 = scmp.ne.s32.totalorder %s83, %s84
      %p96 = scmp.eq.s32.totalorder %s27, 1
      %p97 = por %p95, %p96
      %p99 = scmp.ne.s32.totalorder %s84, %s98
      %p100 = scmp.eq.s32.totalorder %s27, 0
      %p101 = por %p99, %p100
      %s103 = sadd.s32 %s102, 1
      %p106 = scmp.eq.s32.totalorder %s21, 1
      %p107 = scmp.ne.s32.totalorder %s102, %s104
      %p108 = scmp.eq.s32.totalorder %s21, 0
      %p109 = por %p107, %p108
      %p110 = scmp.ne.s32.totalorder %s102, %s104
      %p111 = scmp.eq.s32.totalorder %s26, 1
      %p112 = por %p110, %p111
      %p113 = scmp.ne.s32.totalorder %s104, %s105
      %p114 = scmp.eq.s32.totalorder %s26, 0
      %p115 = por %p113, %p114
      %p116 = scmp.ne.s32.totalorder %s104, %s105
      %p117 = scmp.eq.s32.totalorder %s27, 1
      %p118 = por %p116, %p117
      %p120 = scmp.ne.s32.totalorder %s105, %s119
      %p121 = scmp.eq.s32.totalorder %s27, 0
      %p122 = por %p120, %p121
      %s124 = sadd.s32 %s123, 1
      %p127 = scmp.eq.s32.totalorder %s21, 1
      %p128 = scmp.ne.s32.totalorder %s123, %s125
      %p129 = scmp.eq.s32.totalorder %s21, 0
      %p130 = por %p128, %p129
      %p131 = scmp.ne.s32.totalorder %s123, %s125
      %p132 = scmp.eq.s32.totalorder %s26, 1
      %p133 = por %p131, %p132
      %p134 = scmp.ne.s32.totalorder %s125, %s126
      %p135 = scmp.eq.s32.totalorder %s26, 0
      %p136 = por %p134, %p135
      %p137 = scmp.ne.s32.totalorder %s125, %s126
      %p138 = scmp.eq.s32.totalorder %s27, 1
      %p139 = por %p137, %p138
      %p141 = scmp.ne.s32.totalorder %s126, %s140
      %p142 = scmp.eq.s32.totalorder %s27, 0
      %p143 = por %p141, %p142
      %s145 = sadd.s32 %s144, 1
      %p148 = scmp.eq.s32.totalorder %s21, 1
      %p149 = scmp.ne.s32.totalorder %s144, %s146
      %p150 = scmp.eq.s32.totalorder %s21, 0
      %p151 = por %p149, %p150
      %p152 = scmp.ne.s32.totalorder %s144, %s146
      %p153 = scmp.eq.s32.totalorder %s26, 1
      %p154 = por %p152, %p153
      %p155 = scmp.ne.s32.totalorder %s146, %s147
      %p156 = scmp.eq.s32.totalorder %s26, 0
      %p157 = por %p155, %p156
      %p158 = scmp.ne.s32.totalorder %s146, %s147
      %p159 = scmp.eq.s32.totalorder %s27, 1
      %p160 = por %p158, %p159
      %p162 = scmp.ne.s32.totalorder %s147, %s161
      %p163 = scmp.eq.s32.totalorder %s27, 0
      %p164 = por %p162, %p163
      %s165 = ssub.s32 %s21, %s28
      %p166 = scmp.eq.s32.totalorder %s165, 0
      %s168 = sadd.s32 %s167, 1
      %s169 = scalar_select %p166, %s167, %s168
      %p172 = pneg %p166
      %p173 = scmp.eq.s32.totalorder %s21, 1
      %p174 = por %p172, %p173
      %p175 = scmp.ne.s32.totalorder %s167, %s170
      %p176 = scmp.eq.s32.totalorder %s21, 0
      %p177 = por %p175, %p176
      %p178 = scmp.ne.s32.totalorder %s167, %s170
      %p179 = scmp.eq.s32.totalorder %s26, 1
      %p180 = por %p178, %p179
      %p181 = scmp.ne.s32.totalorder %s170, %s171
      %p182 = scmp.eq.s32.totalorder %s26, 0
      %p183 = por %p181, %p182
      %p184 = scmp.ne.s32.totalorder %s170, %s171
      %p185 = scmp.eq.s32.totalorder %s27, 1
      %p186 = por %p184, %p185
      %p188 = scmp.ne.s32.totalorder %s171, %s187
      %p189 = scmp.eq.s32.totalorder %s27, 0
      %p190 = por %p188, %p189
      %s191 = ssub.s32 %s21, %s28
      %p192 = scmp.eq.s32.totalorder %s191, 0
      %s194 = sadd.s32 %s193, 1
      %s195 = scalar_select %p192, %s193, %s194
      %p198 = pneg %p192
      %p199 = scmp.eq.s32.totalorder %s21, 1
      %p200 = por %p198, %p199
      %p201 = scmp.ne.s32.totalorder %s193, %s196
      %p202 = scmp.eq.s32.totalorder %s21, 0
      %p203 = por %p201, %p202
      %p204 = scmp.ne.s32.totalorder %s193, %s196
      %p205 = scmp.eq.s32.totalorder %s26, 1
      %p206 = por %p204, %p205
      %p207 = scmp.ne.s32.totalorder %s196, %s197
      %p208 = scmp.eq.s32.totalorder %s26, 0
      %p209 = por %p207, %p208
      %p210 = scmp.ne.s32.totalorder %s196, %s197
      %p211 = scmp.eq.s32.totalorder %s27, 1
      %p212 = por %p210, %p211
      %p214 = scmp.ne.s32.totalorder %s197, %s213
      %p215 = scmp.eq.s32.totalorder %s27, 0
      %p216 = por %p214, %p215
      %p217 = scmp.le.s32.totalorder 1, %s21
      %p218 = scmp.lt.s32.totalorder %s21, 3
      %p219 = pnand %p217, %p218
      %p220 = pneg %p219
      // Predicated region
      $region9: #{tpu_custom_call.1} parent=5 // pred_check
        _
      $region10: #{tpu_custom_call.1} parent=5 // pred_check_branch
        %222 = sbr.rel (%p219) target = $region12
      $region11: #{tpu_custom_call.1} parent=5 // pred_region
        %s223 = ssub.s32 %s21, 1
        // Predicated region
        $region13: #{tpu_custom_call.1} parent=11 // pred_check
          %p224 = pneg %p94
        $region14: #{tpu_custom_call.1} parent=11 // pred_check_branch
          %226 = sbr.rel (%p224) target = $region16
        $region15: #{tpu_custom_call.1} parent=11 // pred_region
          _
        $region16: #{tpu_custom_call.1} parent=11 // pred_fallthru
          _
        // Predicated region
        $region17: #{tpu_custom_call.1} parent=11 // pred_check
          %p227 = pneg %p115
        $region18: #{tpu_custom_call.1} parent=11 // pred_check_branch
          %229 = sbr.rel (%p227) target = $region20
        $region19: #{tpu_custom_call.1} parent=11 // pred_region
          _
        $region20: #{tpu_custom_call.1} parent=11 // pred_fallthru
          _
        // Predicated region
        $region21: #{tpu_custom_call.1} parent=11 // pred_check
          %p230 = pneg %p136
        $region22: #{tpu_custom_call.1} parent=11 // pred_check_branch
          %232 = sbr.rel (%p230) target = $region24
        $region23: #{tpu_custom_call.1} parent=11 // pred_region
          _
        $region24: #{tpu_custom_call.1} parent=11 // pred_fallthru
          _
        // Predicated region
        $region25: #{tpu_custom_call.1} parent=11 // pred_check
          %p233 = pneg %p157
        $region26: #{tpu_custom_call.1} parent=11 // pred_check_branch
          %235 = sbr.rel (%p233) target = $region28
        $region27: #{tpu_custom_call.1} parent=11 // pred_region
          _
        $region28: #{tpu_custom_call.1} parent=11 // pred_fallthru
          _
      $region12: #{tpu_custom_call.1} parent=5 // pred_fallthru
        _
      %p236 = scmp.lt.s32.totalorder %s21, 2
      // Predicated region
      $region29: #{tpu_custom_call.1} parent=5 // pred_check
        %p237 = pneg %p236
      $region30: #{tpu_custom_call.1} parent=5 // pred_check_branch
        %239 = sbr.rel (%p237) target = $region32
      $region31: #{tpu_custom_call.1} parent=5 // pred_region
        // Predicated region
        $region33: #{tpu_custom_call.1} parent=31 // pred_check
          %p240 = pneg %p41
        $region34: #{tpu_custom_call.1} parent=31 // pred_check_branch
          %242 = sbr.rel (%p240) target = $region36
        $region35: #{tpu_custom_call.1} parent=31 // pred_region
          %s243 = sand.u32 %s31, 1
          %s244 = sand.u32 %s31, 1
          %s245 = smul.addr %s244, 24
          %s246 = scalar_lea.vmem [#allocation3], %s245
          %s247 = smul.addr %s21, 4
          %s248 = scalar_lea.vmem %s0, %s247
          // Predicated region
          $region37: #{tpu_custom_call.1} parent=35 // pred_check
            _
          $region38: #{tpu_custom_call.1} parent=35 // pred_check_branch
            %250 = sbr.rel (0) target = $region40
          $region39: #{tpu_custom_call.1} parent=35 // pred_region
            // Predicated region
            $region41: #{tpu_custom_call.1} parent=39 // pred_check
              _
            $region42: #{tpu_custom_call.1} parent=39 // pred_check_branch
              %252 = sbr.rel target = $region44
            $region43: #{tpu_custom_call.1} parent=39 // pred_region
              // Predicated region
              $region56: #{tpu_custom_call.1} parent=43 // pred_check
                _
              $region57: #{tpu_custom_call.1} parent=43 // pred_check_branch
                %277 = sbr.rel (0) target = $region59
              $region58: #{tpu_custom_call.1} parent=43 // pred_region
                loop: start=0, step=1, limit=1
                $region60: #{tpu_custom_call.1} parent=58 // loop_pre_header
                  _
                $region61: #{tpu_custom_call.1} parent=58 // loop_header
                  %s279 = sphi 0, %s283
                  %p280 = scmp.ge.s32.totalorder %s279, 1
                  %s284 = sphi %s248, %s248
                  %s285 = sphi %s246, %s246
                $region62: #{tpu_custom_call.1} parent=58 // loop_header_branch
                  %282 = sbr.rel (%p280) target = $region66
                $region63: #{tpu_custom_call.1} parent=58 // loop_body
                  _
                $region64: #{tpu_custom_call.1} parent=58 // loop_footer
                  %s283 = sadd.s32 1, %s279
                $region65: #{tpu_custom_call.1} parent=58 // loop_footer_branch
                  %278 = sbr.rel target = $region61
                $region66: #{tpu_custom_call.1} parent=58 // loop_exit
                  _
                loop: start=0, step=1, limit=1
                $region67: #{tpu_custom_call.1} parent=58 // loop_pre_header
                  _
                $region68: #{tpu_custom_call.1} parent=58 // loop_header
                  %s288 = sphi 0, %s292
                  %p289 = scmp.ge.s32.totalorder %s288, 1
                  %s293 = sphi %s248, %s248
                  %s294 = sphi %s246, %s246
                $region69: #{tpu_custom_call.1} parent=58 // loop_header_branch
                  %291 = sbr.rel (%p289) target = $region73
                $region70: #{tpu_custom_call.1} parent=58 // loop_body
                  %v295 = vld [vmem:[%s293] sm:$0xf]
                  %296 = vst [vmem:[%s294] sm:$0xf] %v295
                  %v297 = vld [vmem:[%s293 + $0x8] sm:$0xf]
                  %298 = vst [vmem:[%s294 + $0x4] sm:$0xf] %v297
                  %v299 = vld [vmem:[%s293 + $0x10] sm:$0xf]
                  %300 = vst [vmem:[%s294 + $0x8] sm:$0xf] %v299
                  %v301 = vld [vmem:[%s293 + $0x18] sm:$0xf]
                  %302 = vst [vmem:[%s294 + $0xc] sm:$0xf] %v301
                  %v303 = vld [vmem:[%s293 + $0x20] sm:$0xf]
                  %304 = vst [vmem:[%s294 + $0x10] sm:$0xf] %v303
                  %v305 = vld [vmem:[%s293 + $0x28] sm:$0xf]
                  %306 = vst [vmem:[%s294 + $0x14] sm:$0xf] %v305
                $region71: #{tpu_custom_call.1} parent=58 // loop_footer
                  %s292 = sadd.s32 1, %s288
                $region72: #{tpu_custom_call.1} parent=58 // loop_footer_branch
                  %287 = sbr.rel target = $region68
                $region73: #{tpu_custom_call.1} parent=58 // loop_exit
                  _
              $region59: #{tpu_custom_call.1} parent=43 // pred_fallthru
                _
            $region44: #{tpu_custom_call.1} parent=39 // pred_fallthru
              _
            // Predicated region
            $region45: #{tpu_custom_call.1} parent=39 // pred_check
              _
            $region46: #{tpu_custom_call.1} parent=39 // pred_check_branch
              %254 = sbr.rel (0) target = $region48
            $region47: #{tpu_custom_call.1} parent=39 // pred_region
              loop: start=0, step=1, limit=1
              $region49: #{tpu_custom_call.1} parent=47 // loop_pre_header
                _
              $region50: #{tpu_custom_call.1} parent=47 // loop_header
                %s257 = sphi 0, %s261
                %p258 = scmp.ge.s32.totalorder %s257, 1
                %s262 = sphi %s248, %s248
                %s263 = sphi %s246, %s246
              $region51: #{tpu_custom_call.1} parent=47 // loop_header_branch
                %260 = sbr.rel (%p258) target = $region55
              $region52: #{tpu_custom_call.1} parent=47 // loop_body
                %v264 = vld [vmem:[%s262] sm:$0xf]
                %265 = vst [vmem:[%s263] sm:$0xf] %v264
                %v266 = vld [vmem:[%s262 + $0x8] sm:$0xf]
                %267 = vst [vmem:[%s263 + $0x4] sm:$0xf] %v266
                %v268 = vld [vmem:[%s262 + $0x10] sm:$0xf]
                %269 = vst [vmem:[%s263 + $0x8] sm:$0xf] %v268
                %v270 = vld [vmem:[%s262 + $0x18] sm:$0xf]
                %271 = vst [vmem:[%s263 + $0xc] sm:$0xf] %v270
                %v272 = vld [vmem:[%s262 + $0x20] sm:$0xf]
                %273 = vst [vmem:[%s263 + $0x10] sm:$0xf] %v272
                %v274 = vld [vmem:[%s262 + $0x28] sm:$0xf]
                %275 = vst [vmem:[%s263 + $0x14] sm:$0xf] %v274
              $region53: #{tpu_custom_call.1} parent=47 // loop_footer
                %s261 = sadd.s32 1, %s257
              $region54: #{tpu_custom_call.1} parent=47 // loop_footer_branch
                %256 = sbr.rel target = $region50
              $region55: #{tpu_custom_call.1} parent=47 // loop_exit
                _
            $region48: #{tpu_custom_call.1} parent=39 // pred_fallthru
              _
          $region40: #{tpu_custom_call.1} parent=35 // pred_fallthru
            _
          %307 = vnop
        $region36: #{tpu_custom_call.1} parent=31 // pred_fallthru
          _
        // Predicated region
        $region74: #{tpu_custom_call.1} parent=31 // pred_check
          %p308 = pneg %p67
        $region75: #{tpu_custom_call.1} parent=31 // pred_check_branch
          %310 = sbr.rel (%p308) target = $region77
        $region76: #{tpu_custom_call.1} parent=31 // pred_region
          %s311 = sand.u32 %s57, 1
          %s312 = sand.u32 %s57, 1
          %s313 = smul.addr %s312, 32
          %s314 = scalar_lea.vmem [#allocation4], %s313
          %s315 = smul.addr %s21, 8
          %s316 = scalar_lea.vmem %s1, %s315
          // Predicated region
          $region78: #{tpu_custom_call.1} parent=76 // pred_check
            _
          $region79: #{tpu_custom_call.1} parent=76 // pred_check_branch
            %318 = sbr.rel (0) target = $region81
          $region80: #{tpu_custom_call.1} parent=76 // pred_region
            // Predicated region
            $region82: #{tpu_custom_call.1} parent=80 // pred_check
              _
            $region83: #{tpu_custom_call.1} parent=80 // pred_check_branch
              %320 = sbr.rel (0) target = $region85
            $region84: #{tpu_custom_call.1} parent=80 // pred_region
              // Predicated region
              $region97: #{tpu_custom_call.1} parent=84 // pred_check
                _
              $region98: #{tpu_custom_call.1} parent=84 // pred_check_branch
                %341 = sbr.rel (0) target = $region100
              $region99: #{tpu_custom_call.1} parent=84 // pred_region
                loop: start=0, step=1, limit=1
                $region101: #{tpu_custom_call.1} parent=99 // loop_pre_header
                  _
                $region102: #{tpu_custom_call.1} parent=99 // loop_header
                  %s343 = sphi 0, %s347
                  %p344 = scmp.ge.s32.totalorder %s343, 1
                  %s348 = sphi %s316, %s316
                  %s349 = sphi %s314, %s314
                $region103: #{tpu_custom_call.1} parent=99 // loop_header_branch
                  %346 = sbr.rel (%p344) target = $region107
                $region104: #{tpu_custom_call.1} parent=99 // loop_body
                  %v350 = vld [vmem:[%s348] sm:$0xff]
                  %351 = vst [vmem:[%s349] sm:$0xff] %v350
                  %v352 = vld [vmem:[%s348 + $0x10] sm:$0xff]
                  %353 = vst [vmem:[%s349 + $0x8] sm:$0xff] %v352
                  %v354 = vld [vmem:[%s348 + $0x20] sm:$0xff]
                  %355 = vst [vmem:[%s349 + $0x10] sm:$0xff] %v354
                  %v356 = vld [vmem:[%s348 + $0x30] sm:$0xff]
                  %357 = vst [vmem:[%s349 + $0x18] sm:$0xff] %v356
                $region105: #{tpu_custom_call.1} parent=99 // loop_footer
                  %s347 = sadd.s32 1, %s343
                $region106: #{tpu_custom_call.1} parent=99 // loop_footer_branch
                  %342 = sbr.rel target = $region102
                $region107: #{tpu_custom_call.1} parent=99 // loop_exit
                  _
              $region100: #{tpu_custom_call.1} parent=84 // pred_fallthru
                _
              // Predicated region
              $region108: #{tpu_custom_call.1} parent=84 // pred_check
                _
              $region109: #{tpu_custom_call.1} parent=84 // pred_check_branch
                %359 = sbr.rel target = $region111
              $region110: #{tpu_custom_call.1} parent=84 // pred_region
                _
              $region111: #{tpu_custom_call.1} parent=84 // pred_fallthru
                _
            $region85: #{tpu_custom_call.1} parent=80 // pred_fallthru
              _
            // Predicated region
            $region86: #{tpu_custom_call.1} parent=80 // pred_check
              _
            $region87: #{tpu_custom_call.1} parent=80 // pred_check_branch
              %322 = sbr.rel target = $region89
            $region88: #{tpu_custom_call.1} parent=80 // pred_region
              loop: start=0, step=1, limit=1
              $region90: #{tpu_custom_call.1} parent=88 // loop_pre_header
                _
              $region91: #{tpu_custom_call.1} parent=88 // loop_header
                %s325 = sphi 0, %s329
                %p326 = scmp.ge.s32.totalorder %s325, 1
                %s330 = sphi %s316, %s316
                %s331 = sphi %s314, %s314
              $region92: #{tpu_custom_call.1} parent=88 // loop_header_branch
                %328 = sbr.rel (%p326) target = $region96
              $region93: #{tpu_custom_call.1} parent=88 // loop_body
                %v332 = vld [vmem:[%s330] sm:$0xff]
                %333 = vst [vmem:[%s331] sm:$0xff] %v332
                %v334 = vld [vmem:[%s330 + $0x10] sm:$0xff]
                %335 = vst [vmem:[%s331 + $0x8] sm:$0xff] %v334
                %v336 = vld [vmem:[%s330 + $0x20] sm:$0xff]
                %337 = vst [vmem:[%s331 + $0x10] sm:$0xff] %v336
                %v338 = vld [vmem:[%s330 + $0x30] sm:$0xff]
                %339 = vst [vmem:[%s331 + $0x18] sm:$0xff] %v338
              $region94: #{tpu_custom_call.1} parent=88 // loop_footer
                %s329 = sadd.s32 1, %s325
              $region95: #{tpu_custom_call.1} parent=88 // loop_footer_branch
                %324 = sbr.rel target = $region91
              $region96: #{tpu_custom_call.1} parent=88 // loop_exit
                _
            $region89: #{tpu_custom_call.1} parent=80 // pred_fallthru
              _
          $region81: #{tpu_custom_call.1} parent=76 // pred_fallthru
            _
          %360 = vnop
        $region77: #{tpu_custom_call.1} parent=31 // pred_fallthru
          _
      $region32: #{tpu_custom_call.1} parent=5 // pred_fallthru
        _
      %p361 = scmp.le.s32.totalorder 1, %s21
      %p362 = scmp.lt.s32.totalorder %s21, 3
      %p363 = pnand %p361, %p362
      %p364 = pneg %p363
      // Predicated region
      $region112: #{tpu_custom_call.1} parent=5 // pred_check
        _
      $region113: #{tpu_custom_call.1} parent=5 // pred_check_branch
        %366 = sbr.rel (%p363) target = $region115
      $region114: #{tpu_custom_call.1} parent=5 // pred_region
        %s367 = ssub.s32 %s21, 1
        %s368 = sand.u32 %s34, 1
        %s369 = sand.u32 %s34, 1
        %s370 = smul.addr %s369, 24
        %s371 = scalar_lea.vmem [#allocation3], %s370
        // Predicated region
        $region116: #{tpu_custom_call.1} parent=114 // pred_check
          %p372 = pneg %p47
        $region117: #{tpu_custom_call.1} parent=114 // pred_check_branch
          %374 = sbr.rel (%p372) target = $region119
        $region118: #{tpu_custom_call.1} parent=114 // pred_region
          _
        $region119: #{tpu_custom_call.1} parent=114 // pred_fallthru
          _
        %s375 = sand.u32 %s60, 1
        %s376 = sand.u32 %s60, 1
        %s377 = smul.addr %s376, 32
        %s378 = scalar_lea.vmem [#allocation4], %s377
        // Predicated region
        $region120: #{tpu_custom_call.1} parent=114 // pred_check
          %p379 = pneg %p73
        $region121: #{tpu_custom_call.1} parent=114 // pred_check_branch
          %381 = sbr.rel (%p379) target = $region123
        $region122: #{tpu_custom_call.1} parent=114 // pred_region
          _
        $region123: #{tpu_custom_call.1} parent=114 // pred_fallthru
          _
        %s382 = sand.u32 %s34, 1
        %s383 = sand.u32 %s34, 1
        %s384 = smul.addr %s383, 24
        %s385 = scalar_lea.vmem [#allocation3], %s384
        %p386 = pneg %p47
        %p387 = pneg %p44
        %s388 = sand.u32 %s60, 1
        %s389 = sand.u32 %s60, 1
        %s390 = smul.addr %s389, 32
        %s391 = scalar_lea.vmem [#allocation4], %s390
        %p392 = pneg %p73
        %p393 = pneg %p70
        %p394 = pneg %p94
        %p395 = pneg %p91
        %p396 = pneg %p115
        %p397 = pneg %p112
        %p398 = pneg %p136
        %p399 = pneg %p133
        %p400 = pneg %p157
        %p401 = pneg %p154
        %p402 = pneg %p183
        %p403 = pneg %p180
        %s404 = sand.u32 %s170, 1
        %s405 = scalar_lea.sflag [#allocation6], %s404
        %s406 = sand.u32 %s170, 1
        %s407 = smul.addr %s406, 32
        %s408 = scalar_lea.vmem [#allocation5], %s407
        %p409 = pneg %p209
        %p410 = pneg %p206
        %s411 = sand.u32 %s196, 1
        %s412 = scalar_lea.sflag [#allocation8], %s411
        %s413 = sand.u32 %s196, 1
        %s414 = scalar_lea.vmem [#allocation7], %s413
        %v416 = vld [vmem:[%s378] sm:$0xff]
        %v417 = vld [vmem:[%s378 + $0x8] sm:$0xff]
        %v418 = vld [vmem:[%s378 + $0x10] sm:$0xff]
        %v419 = vld [vmem:[%s378 + $0x18] sm:$0xff]
        %v420 = vld [vmem:[%s2] sm:$0xf]
        %v421 = vld [vmem:[%s2 + $0x4] sm:$0xf]
        %v422 = vld [vmem:[%s2 + $0x8] sm:$0xf]
        %v423 = vld [vmem:[%s2 + $0xc] sm:$0xf]
        %v424 = vld [vmem:[%s2 + $0x10] sm:$0xf]
        %v425 = vld [vmem:[%s2 + $0x14] sm:$0xf]
        %v426 = vld [vmem:[%s2 + $0x18] sm:$0xf]
        %v427 = vld [vmem:[%s2 + $0x1c] sm:$0xf]
        %v428 = vld [vmem:[%s2 + $0x20] sm:$0xf]
        %v429 = vld [vmem:[%s2 + $0x24] sm:$0xf]
        %v430 = vld [vmem:[%s2 + $0x28] sm:$0xf]
        %v431 = vld [vmem:[%s2 + $0x2c] sm:$0xf]
        %v432 = vld [vmem:[%s2 + $0x30] sm:$0xf]
        %v433 = vld [vmem:[%s2 + $0x34] sm:$0xf]
        %v434 = vld [vmem:[%s2 + $0x38] sm:$0xf]
        %v435 = vld [vmem:[%s2 + $0x3c] sm:$0xf]
        %v436 = vld [vmem:[%s371] sm:$0xf]
        %v437 = vld [vmem:[%s371 + $0x4] sm:$0xf]
        %v438 = vld [vmem:[%s371 + $0x8] sm:$0xf]
        %v439 = vld [vmem:[%s371 + $0xc] sm:$0xf]
        %v440 = vld [vmem:[%s371 + $0x10] sm:$0xf]
        %v441 = vld [vmem:[%s371 + $0x14] sm:$0xf]
        %v458 = vunpack.c.l.b16 %v420
        %v459 = vunpack.c.l.b16 %v421
        %v460 = vunpack.c.l.b16 %v422
        %v461 = vunpack.c.l.b16 %v423
        %v462 = vunpack.c.l.b16 %v424
        %v463 = vunpack.c.l.b16 %v425
        %v464 = vunpack.c.l.b16 %v426
        %v465 = vunpack.c.l.b16 %v427
        %v466 = vunpack.c.l.b16 %v428
        %v467 = vunpack.c.l.b16 %v429
        %v468 = vunpack.c.l.b16 %v430
        %v469 = vunpack.c.l.b16 %v431
        %v470 = vunpack.c.l.b16 %v432
        %v471 = vunpack.c.l.b16 %v433
        %v472 = vunpack.c.l.b16 %v434
        %v473 = vunpack.c.l.b16 %v435
        %v474 = vpack.c.b16 %v459, %v458
        %v475 = vpack.c.b16 %v461, %v460
        %v476 = vpack.c.b16 %v463, %v462
        %v477 = vpack.c.b16 %v465, %v464
        %v478 = vpack.c.b16 %v467, %v466
        %v479 = vpack.c.b16 %v469, %v468
        %v480 = vpack.c.b16 %v471, %v470
        %v481 = vpack.c.b16 %v473, %v472
        %v488 = vunpack.c.l.b16 %v436
        %v489 = vunpack.c.l.b16 %v437
        %v490 = vunpack.c.l.b16 %v438
        %v491 = vunpack.c.l.b16 %v439
        %v492 = vunpack.c.l.b16 %v440
        %v493 = vunpack.c.l.b16 %v441
        %v494 = vpack.c.b16 %v489, %v488
        %v495 = vpack.c.b16 %v491, %v490
        %v496 = vpack.c.b16 %v493, %v492
        %vm500 = vcmask 392192
        %v502 = vsel %vm500, %v474, 0
        %v505 = vsel %vm500, %v475, 0
        %v508 = vsel %vm500, %v476, 0
        %v511 = vsel %vm500, %v477, 0
        %v514 = vsel %vm500, %v478, 0
        %v517 = vsel %vm500, %v479, 0
        %v520 = vsel %vm500, %v480, 0
        %v523 = vsel %vm500, %v481, 0
        %525 = vmatprep.subr.bf16.mxu0 0
        %526 = vmatpush1.bf16.msra.mxu0 %v494
        %527 = vmatprep.subr.bf16.mxu0 0
        %528 = vmatpush1.bf16.msra.mxu0 %v495
        %529 = vmatprep.subr.bf16.mxu0 0
        %530 = vmatpush1.bf16.msra.mxu0 %v496
        %531 = vmatprep.subr.bf16.mxu0 0
        %532 = vmatpush1.bf16.msra.mxu0 0
        %533 = vmatprep.subr.bf16.mxu0 0
        %534 = vmatpush1.bf16.msra.mxu0 0
        %535 = vmatprep.subr.bf16.mxu0 0
        %536 = vmatpush1.bf16.msra.mxu0 0
        %537 = vmatprep.subr.bf16.mxu0 0
        %538 = vmatpush1.bf16.msra.mxu0 0
        %539 = vmatprep.subr.bf16.mxu0 0
        %540 = vmatpush1.bf16.msra.mxu0 0
        %541 = vmatprep.subr.bf16.mxu0 0
        %542 = vmatpush1.bf16.msra.mxu0 0
        %543 = vmatprep.subr.bf16.mxu0 0
        %544 = vmatpush1.bf16.msra.mxu0 0
        %545 = vmatprep.subr.bf16.mxu0 0
        %546 = vmatpush1.bf16.msra.mxu0 0
        %547 = vmatprep.subr.bf16.mxu0 0
        %548 = vmatpush1.bf16.msra.mxu0 0
        %549 = vmatprep.subr.bf16.mxu0 0
        %550 = vmatpush1.bf16.msra.mxu0 0
        %551 = vmatprep.subr.bf16.mxu0 0
        %552 = vmatpush1.bf16.msra.mxu0 0
        %553 = vmatprep.subr.bf16.mxu0 0
        %554 = vmatpush1.bf16.msra.mxu0 0
        %555 = vmatprep.subr.bf16.mxu0 0
        %556 = vmatpush1.bf16.msra.mxu0 0
        %557 = vmatprep.mubr.bf16.mxu0 0
        %558 = vmatmul.mubr.bf16.gmra.mrb[0].mxu0 %v502
        %v559 = vpop.f32.mrb[0].mxu0
        %v560 = vadd.f32 0.0, %v559
        %v561 = vpop.f32.mrb[0].mxu0
        %v562 = vpop.f32.mrb[0].mxu0
        %v563 = vadd.f32 0.0, %v562
        %v564 = vpop.f32.mrb[0].mxu0
        %565 = vmatprep.mubr.bf16.mxu0 0
        %566 = vmatmul.mubr.bf16.gmra.mrb[0].mxu0 %v505
        %v567 = vpop.f32.mrb[0].mxu0
        %v568 = vadd.f32 0.0, %v567
        %v569 = vpop.f32.mrb[0].mxu0
        %v570 = vpop.f32.mrb[0].mxu0
        %v571 = vadd.f32 0.0, %v570
        %v572 = vpop.f32.mrb[0].mxu0
        %573 = vmatprep.mubr.bf16.mxu0 0
        %574 = vmatmul.mubr.bf16.gmra.mrb[0].mxu0 %v508
        %v575 = vpop.f32.mrb[0].mxu0
        %v576 = vadd.f32 0.0, %v575
        %v577 = vpop.f32.mrb[0].mxu0
        %v578 = vpop.f32.mrb[0].mxu0
        %v579 = vadd.f32 0.0, %v578
        %v580 = vpop.f32.mrb[0].mxu0
        %581 = vmatprep.mubr.bf16.mxu0 0
        %582 = vmatmul.mubr.bf16.gmra.mrb[0].mxu0 %v511
        %v583 = vpop.f32.mrb[0].mxu0
        %v584 = vadd.f32 0.0, %v583
        %v585 = vpop.f32.mrb[0].mxu0
        %v586 = vpop.f32.mrb[0].mxu0
        %v587 = vadd.f32 0.0, %v586
        %v588 = vpop.f32.mrb[0].mxu0
        %589 = vmatprep.mubr.bf16.mxu0 0
        %590 = vmatmul.mubr.bf16.gmra.mrb[0].mxu0 %v514
        %v591 = vpop.f32.mrb[0].mxu0
        %v592 = vadd.f32 0.0, %v591
        %v593 = vpop.f32.mrb[0].mxu0
        %v594 = vpop.f32.mrb[0].mxu0
        %v595 = vadd.f32 0.0, %v594
        %v596 = vpop.f32.mrb[0].mxu0
        %597 = vmatprep.mubr.bf16.mxu0 0
        %598 = vmatmul.mubr.bf16.gmra.mrb[0].mxu0 %v517
        %v599 = vpop.f32.mrb[0].mxu0
        %v600 = vadd.f32 0.0, %v599
        %v601 = vpop.f32.mrb[0].mxu0
        %v602 = vpop.f32.mrb[0].mxu0
        %v603 = vadd.f32 0.0, %v602
        %v604 = vpop.f32.mrb[0].mxu0
        %605 = vmatprep.mubr.bf16.mxu0 0
        %606 = vmatmul.mubr.bf16.gmra.mrb[0].mxu0 %v520
        %v607 = vpop.f32.mrb[0].mxu0
        %v608 = vadd.f32 0.0, %v607
        %v609 = vpop.f32.mrb[0].mxu0
        %v610 = vpop.f32.mrb[0].mxu0
        %v611 = vadd.f32 0.0, %v610
        %v612 = vpop.f32.mrb[0].mxu0
        %613 = vmatprep.mubr.bf16.mxu0 0
        %614 = vmatmul.mubr.bf16.gmra.mrb[0].mxu0 %v523
        %v615 = vpop.f32.mrb[0].mxu0
        %v616 = vadd.f32 0.0, %v615
        %v617 = vpop.f32.mrb[0].mxu0
        %v618 = vpop.f32.mrb[0].mxu0
        %v619 = vadd.f32 0.0, %v618
        %v620 = vpop.f32.mrb[0].mxu0
        %621 = vdwg.mxu0
        %v622 = vld [vmem:[%s3] sm:$0xff]
        %v623 = vld [vmem:[%s3 + $0x8] sm:$0xff]
        %v624 = vld [vmem:[%s3 + $0x10] sm:$0xff]
        %v625 = vld [vmem:[%s3 + $0x18] sm:$0xff]
        %v626 = vld [vmem:[%s3 + $0x20] sm:$0xff]
        %v627 = vld [vmem:[%s3 + $0x28] sm:$0xff]
        %v628 = vld [vmem:[%s3 + $0x30] sm:$0xff]
        %v629 = vld [vmem:[%s3 + $0x38] sm:$0xff]
        %v630 = vld [vmem:[%s3 + $0x40] sm:$0xff]
        %v631 = vld [vmem:[%s3 + $0x48] sm:$0xff]
        %v632 = vld [vmem:[%s3 + $0x50] sm:$0xff]
        %v633 = vld [vmem:[%s3 + $0x58] sm:$0xff]
        %635 = vset.pattern.permute.xlu0 0
        %636 = vperm.xlu0 %635, %v622
        %v637 = vpop.permute.xlu0 %636
        %640 = vset.pattern.permute.xlu0 0
        %641 = vperm.xlu0 %640, %v623
        %v642 = vpop.permute.xlu0 %641
        %645 = vset.pattern.permute.xlu0 0
        %646 = vperm.xlu0 %645, %v624
        %v647 = vpop.permute.xlu0 %646
        %650 = vset.pattern.permute.xlu0 0
        %651 = vperm.xlu0 %650, %v625
        %v652 = vpop.permute.xlu0 %651
        %v654 = vmul.f32 %v637, %v416
        %v655 = vmul.f32 %v642, %v417
        %v656 = vmul.f32 %v647, %v418
        %v657 = vmul.f32 %v652, %v419
        %v658 = vadd.f32 %v560, %v654
        %v659 = vadd.f32 %v563, %v655
        %v660 = vadd.f32 %v568, %v656
        %v661 = vadd.f32 %v571, %v657
        %v662 = vxor.u32 %v658, 2147483648
        %v663 = vxor.u32 %v659, 2147483648
        %v664 = vxor.u32 %v660, 2147483648
        %v665 = vxor.u32 %v661, 2147483648
        %v666 = vmul.f32 %v662, 1.442695
        %v667 = vpow.pop %v666
        %v668 = vmul.f32 %v663, 1.442695
        %v669 = vpow.pop %v668
        %v670 = vmul.f32 %v664, 1.442695
        %v671 = vpow.pop %v670
        %v672 = vmul.f32 %v665, 1.442695
        %v673 = vpow.pop %v672
        %v674 = vadd.f32 %v667, 1.0
        %v675 = vadd.f32 %v669, 1.0
        %v676 = vadd.f32 %v671, 1.0
        %v677 = vadd.f32 %v673, 1.0
        %v678 = vrcp.pop %v674
        %v679 = vmul.f32 1.0, %v678
        %v680 = vrcp.pop %v675
        %v681 = vmul.f32 1.0, %v680
        %v682 = vrcp.pop %v676
        %v683 = vmul.f32 1.0, %v682
        %v684 = vrcp.pop %v677
        %v685 = vmul.f32 1.0, %v684
        %687 = vset.pattern.permute.xlu0 0
        %688 = vperm.xlu0 %687, %v626
        %v689 = vpop.permute.xlu0 %688
        %692 = vset.pattern.permute.xlu0 0
        %693 = vperm.xlu0 %692, %v627
        %v694 = vpop.permute.xlu0 %693
        %697 = vset.pattern.permute.xlu0 0
        %698 = vperm.xlu0 %697, %v628
        %v699 = vpop.permute.xlu0 %698
        %702 = vset.pattern.permute.xlu0 0
        %703 = vperm.xlu0 %702, %v629
        %v704 = vpop.permute.xlu0 %703
        %v706 = vmul.f32 %v689, %v416
        %v707 = vmul.f32 %v694, %v417
        %v708 = vmul.f32 %v699, %v418
        %v709 = vmul.f32 %v704, %v419
        %v710 = vadd.f32 %v576, %v706
        %v711 = vadd.f32 %v579, %v707
        %v712 = vadd.f32 %v584, %v708
        %v713 = vadd.f32 %v587, %v709
        %v714 = vxor.u32 %v710, 2147483648
        %v715 = vxor.u32 %v711, 2147483648
        %v716 = vxor.u32 %v712, 2147483648
        %v717 = vxor.u32 %v713, 2147483648
        %v718 = vmul.f32 %v714, 1.442695
        %v719 = vpow.pop %v718
        %v720 = vmul.f32 %v715, 1.442695
        %v721 = vpow.pop %v720
        %v722 = vmul.f32 %v716, 1.442695
        %v723 = vpow.pop %v722
        %v724 = vmul.f32 %v717, 1.442695
        %v725 = vpow.pop %v724
        %v726 = vadd.f32 %v719, 1.0
        %v727 = vadd.f32 %v721, 1.0
        %v728 = vadd.f32 %v723, 1.0
        %v729 = vadd.f32 %v725, 1.0
        %v730 = vrcp.pop %v726
        %v731 = vmul.f32 1.0, %v730
        %v732 = vrcp.pop %v727
        %v733 = vmul.f32 1.0, %v732
        %v734 = vrcp.pop %v728
        %v735 = vmul.f32 1.0, %v734
        %v736 = vrcp.pop %v729
        %v737 = vmul.f32 1.0, %v736
        %v738 = vtanh.pop %v592
        %v739 = vtanh.pop %v595
        %v740 = vtanh.pop %v600
        %v741 = vtanh.pop %v603
        %v742 = vmul.f32 %v731, %v416
        %v743 = vmul.f32 %v733, %v417
        %v744 = vmul.f32 %v735, %v418
        %v745 = vmul.f32 %v737, %v419
        %v746 = vmul.f32 %v679, %v738
        %v747 = vmul.f32 %v681, %v739
        %v748 = vmul.f32 %v683, %v740
        %v749 = vmul.f32 %v685, %v741
        %v750 = vadd.f32 %v742, %v746
        %v751 = vadd.f32 %v743, %v747
        %v752 = vadd.f32 %v744, %v748
        %v753 = vadd.f32 %v745, %v749
        %755 = vset.pattern.permute.xlu0 0
        %756 = vperm.xlu0 %755, %v630
        %v757 = vpop.permute.xlu0 %756
        %760 = vset.pattern.permute.xlu0 0
        %761 = vperm.xlu0 %760, %v631
        %v762 = vpop.permute.xlu0 %761
        %765 = vset.pattern.permute.xlu0 0
        %766 = vperm.xlu0 %765, %v632
        %v767 = vpop.permute.xlu0 %766
        %770 = vset.pattern.permute.xlu0 0
        %771 = vperm.xlu0 %770, %v633
        %v772 = vpop.permute.xlu0 %771
        %v774 = vmul.f32 %v757, %v750
        %v775 = vmul.f32 %v762, %v751
        %v776 = vmul.f32 %v767, %v752
        %v777 = vmul.f32 %v772, %v753
        %v778 = vadd.f32 %v608, %v774
        %v779 = vadd.f32 %v611, %v775
        %v780 = vadd.f32 %v616, %v776
        %v781 = vadd.f32 %v619, %v777
        %v782 = vxor.u32 %v778, 2147483648
        %v783 = vxor.u32 %v779, 2147483648
        %v784 = vxor.u32 %v780, 2147483648
        %v785 = vxor.u32 %v781, 2147483648
        %v786 = vmul.f32 %v782, 1.442695
        %v787 = vpow.pop %v786
        %v788 = vmul.f32 %v783, 1.442695
        %v789 = vpow.pop %v788
        %v790 = vmul.f32 %v784, 1.442695
        %v791 = vpow.pop %v790
        %v792 = vmul.f32 %v785, 1.442695
        %v793 = vpow.pop %v792
        %v794 = vadd.f32 %v787, 1.0
        %v795 = vadd.f32 %v789, 1.0
        %v796 = vadd.f32 %v791, 1.0
        %v797 = vadd.f32 %v793, 1.0
        %v798 = vrcp.pop %v794
        %v799 = vmul.f32 1.0, %v798
        %v800 = vrcp.pop %v795
        %v801 = vmul.f32 1.0, %v800
        %v802 = vrcp.pop %v796
        %v803 = vmul.f32 1.0, %v802
        %v804 = vrcp.pop %v797
        %v805 = vmul.f32 1.0, %v804
        %v806 = vtanh.pop %v750
        %v807 = vtanh.pop %v751
        %v808 = vtanh.pop %v752
        %v809 = vtanh.pop %v753
        %v810 = vmul.f32 %v799, %v806
        %v811 = vmul.f32 %v801, %v807
        %v812 = vmul.f32 %v803, %v808
        %v813 = vmul.f32 %v805, %v809
        %v814 = vmax.f32 %v810, 0.0
        %v815 = vmax.f32 %v811, 0.0
        %v816 = vmax.f32 %v812, 0.0
        %v817 = vmax.f32 %v813, 0.0
        %v818 = vld [vmem:[%s4] sm:$0xff]
        %v819 = vld [vmem:[%s4 + $0x8] sm:$0xff]
        %v820 = vld [vmem:[%s4 + $0x10] sm:$0xff]
        %v821 = vld [vmem:[%s4 + $0x18] sm:$0xff]
        %823 = vset.pattern.permute.xlu0 0
        %824 = vperm.xlu0 %823, %v818
        %v825 = vpop.permute.xlu0 %824
        %828 = vset.pattern.permute.xlu0 0
        %829 = vperm.xlu0 %828, %v819
        %v830 = vpop.permute.xlu0 %829
        %833 = vset.pattern.permute.xlu0 0
        %834 = vperm.xlu0 %833, %v820
        %v835 = vpop.permute.xlu0 %834
        %838 = vset.pattern.permute.xlu0 0
        %839 = vperm.xlu0 %838, %v821
        %v840 = vpop.permute.xlu0 %839
        %v842 = vmul.f32 %v814, %v825
        %v843 = vmul.f32 %v815, %v830
        %v844 = vmul.f32 %v816, %v835
        %v845 = vmul.f32 %v817, %v840
        %v846 = vadd.f32 %v842, %v843
        %v847 = vadd.f32 %v846, %v844
        %v848 = vadd.f32 %v847, %v845
        %v849 = vrot.slane %v848, 4
        %v850 = vadd.f32 %v848, %v849
        %v851 = vrot.slane %v850, 2
        %v852 = vadd.f32 %v850, %v851
        %v853 = vrot.slane %v852, 1
        %v854 = vadd.f32 %v852, %v853
        %s855 = sld [smem:[#allocation2]]
        %v856 = vstv %s855
        %v857 = vadd.f32 %v854, %v856
        %v858 = vpack.c.bf16 %v811, %v810
        %v859 = vpack.c.bf16 %v813, %v812
        %v862 = vunpack.c.l.b16 %v858
        %v863 = vunpack.c.h.b16 %v858
        %v864 = vunpack.c.l.b16 %v859
        %v865 = vunpack.c.h.b16 %v859
        %v866 = vpack.c.b16 %v862, %v862
        %v867 = vpack.c.b16 %v863, %v863
        %v868 = vpack.c.b16 %v864, %v864
        %v869 = vpack.c.b16 %v865, %v865
        %874 = vst [vmem:[%s408] sm:$0xf] %v866
        %875 = vst [vmem:[%s408 + $0x4] sm:$0xf] %v867
        %876 = vst [vmem:[%s408 + $0x8] sm:$0xf] %v868
        %877 = vst [vmem:[%s408 + $0xc] sm:$0xf] %v869
        %v878 = vpack.c.bf16 %v751, %v750
        %v879 = vpack.c.bf16 %v753, %v752
        %v882 = vunpack.c.l.b16 %v878
        %v883 = vunpack.c.h.b16 %v878
        %v884 = vunpack.c.l.b16 %v879
        %v885 = vunpack.c.h.b16 %v879
        %v886 = vpack.c.b16 %v882, %v882
        %v887 = vpack.c.b16 %v883, %v883
        %v888 = vpack.c.b16 %v884, %v884
        %v889 = vpack.c.b16 %v885, %v885
        %894 = vst [vmem:[%s408 + $0x10] sm:$0xf] %v886
        %895 = vst [vmem:[%s408 + $0x14] sm:$0xf] %v887
        %896 = vst [vmem:[%s408 + $0x18] sm:$0xf] %v888
        %897 = vst [vmem:[%s408 + $0x1c] sm:$0xf] %v889
        %898 = vst [vmem:[%s414] sm:$0x1] %v857
        %s899 = sand.u32 %s170, 1
        %s900 = scalar_lea.sflag [#allocation6], %s899
        %s901 = sand.u32 %s170, 1
        %s902 = smul.addr %s901, 32
        %s903 = scalar_lea.vmem [#allocation5], %s902
        %s904 = sand.u32 %s196, 1
        %s905 = scalar_lea.sflag [#allocation8], %s904
        %s906 = sand.u32 %s196, 1
        %s907 = scalar_lea.vmem [#allocation7], %s906
        // Predicated region
        $region124: #{tpu_custom_call.1} parent=114 // pred_check
          %p908 = pneg %p180
        $region125: #{tpu_custom_call.1} parent=114 // pred_check_branch
          %910 = sbr.rel (%p908) target = $region127
        $region126: #{tpu_custom_call.1} parent=114 // pred_region
          %s912 = ssub.s32 512, 512
          %913 = vsyncadd %s900, %s912
          %s914 = smul.addr %s26, 64
          %s915 = scalar_lea.hbm %s6, %s914
          %s916 = sshll.u32 %s903, 4
          %s917 = int_to_ptr.vmem [resolvable:$true] %s916
          %922 = dma.vmem_to_hbm [thread:$0]  %s917, 512, %s915, %s900, 64, 128, 4
        $region127: #{tpu_custom_call.1} parent=114 // pred_fallthru
          _
        // Predicated region
        $region128: #{tpu_custom_call.1} parent=114 // pred_check
          %p923 = pneg %p206
        $region129: #{tpu_custom_call.1} parent=114 // pred_check_branch
          %925 = sbr.rel (%p923) target = $region131
        $region130: #{tpu_custom_call.1} parent=114 // pred_region
          %s927 = ssub.s32 16, 16
          %928 = vsyncadd %s905, %s927
          %s929 = smul.addr %s26, 16
          %s930 = scalar_lea.hbm %s7, %s929
          %s932 = sshll.u32 %s907, 4
          %s933 = int_to_ptr.vmem [resolvable:$true] %s932
          %935 = dma.vmem_to_hbm [thread:$0]  %s933, 16, %s930, %s905
        $region131: #{tpu_custom_call.1} parent=114 // pred_fallthru
          _
      $region115: #{tpu_custom_call.1} parent=5 // pred_fallthru
        _
      %p936 = scmp.le.s32.totalorder 2, %s21
      // Predicated region
      $region132: #{tpu_custom_call.1} parent=5 // pred_check
        %p937 = pneg %p936
      $region133: #{tpu_custom_call.1} parent=5 // pred_check_branch
        %939 = sbr.rel (%p937) target = $region135
      $region134: #{tpu_custom_call.1} parent=5 // pred_region
        %s940 = ssub.s32 %s21, 2
        // Predicated region
        $region136: #{tpu_custom_call.1} parent=134 // pred_check
          %p941 = pneg %p186
        $region137: #{tpu_custom_call.1} parent=134 // pred_check_branch
          %943 = sbr.rel (%p941) target = $region139
        $region138: #{tpu_custom_call.1} parent=134 // pred_region
          %s944 = sand.u32 %s171, 1
          %s945 = scalar_lea.sflag [#allocation6], %s944
          %s946 = sand.u32 %s171, 1
          %s947 = smul.addr %s946, 32
          %s948 = scalar_lea.vmem [#allocation5], %s947
          %949 = dma.done %s945, 512
        $region139: #{tpu_custom_call.1} parent=134 // pred_fallthru
          _
        // Predicated region
        $region140: #{tpu_custom_call.1} parent=134 // pred_check
          %p950 = pneg %p212
        $region141: #{tpu_custom_call.1} parent=134 // pred_check_branch
          %952 = sbr.rel (%p950) target = $region143
        $region142: #{tpu_custom_call.1} parent=134 // pred_region
          %s953 = sand.u32 %s197, 1
          %s954 = scalar_lea.sflag [#allocation8], %s953
          %s955 = sand.u32 %s197, 1
          %s956 = scalar_lea.vmem [#allocation7], %s955
          %957 = dma.done %s954, 16
        $region143: #{tpu_custom_call.1} parent=134 // pred_fallthru
          _
      $region135: #{tpu_custom_call.1} parent=5 // pred_fallthru
        _
    $region6: #{tpu_custom_call.1} parent=1 // loop_footer
      %s25 = sadd.s32 1, %s21
    $region7: #{tpu_custom_call.1} parent=1 // loop_footer_branch
      %20 = sbr.rel target = $region3
    $region8: #{tpu_custom_call.1} parent=1 // loop_exit
      _
    %958 = vsyncpa [#allocation6], 1
    %s959 = scalar_lea.sflag [#allocation6], 1
    %960 = vsyncpa %s959, 1
    %961 = vsyncpa [#allocation8], 1
    %s962 = scalar_lea.sflag [#allocation8], 1
    %963 = vsyncpa %s962, 1

</llo_original>
